<compile_context>
chip_gen: v7x
topology: tpu7x:2x2x1
jax: 0.10.0
libtpu: 0.0.40
codegen_flags: <defaults>
</compile_context>

<pallas_src>
import functools

import jax
import jax.numpy as jnp
from jax.experimental import pallas as pl
from jax.experimental.pallas import tpu as pltpu


def convbert_output_kernel(x_ref, w_ref, params_ref, res_ref, o_ref, *,
                           eps, inv_h):
    # x_ref:      (TR, I)  row-tile of dense input (bf16 -> MXU)
    # w_ref:      (I,  H)  dense weight, stored (in, out), single-buffered
    # params_ref: (8,  H)  f32 param block: row0=bias, row1=gamma, row2=beta
    # res_ref:    (TR, H)  residual (input_tensor) row-tile
    # o_ref:      (TR, H)  output row-tile
    #
    # MXU matmul with bf16 operands, f32 accumulation.
    h = jnp.dot(x_ref[...], w_ref[...], preferred_element_type=jnp.float32)

    params = params_ref[...].astype(jnp.float32)
    bias = params[0:1, :]
    gamma = params[1:2, :]
    beta = params[2:3, :]

    # Bias + residual + LayerNorm epilogue in f32.
    y = h + bias + res_ref[...].astype(jnp.float32)

    # Two-pass moments (numerically safer than E[y^2] - mean^2).
    mean = jnp.sum(y, axis=-1, keepdims=True) * inv_h
    d = y - mean
    var = jnp.sum(d * d, axis=-1, keepdims=True) * inv_h
    norm = d * jax.lax.rsqrt(var + eps)

    # TODO(synk): nn.Dropout is identity in eval mode; training-mode dropout
    # (pltpu.prng_random_bits mask) is not emitted here.
    o_ref[...] = (norm * gamma + beta).astype(o_ref.dtype)


def _vmem_capacity_bytes(default=64 << 20):
    # Generation-aware VMEM cap (v7x has only 64 MiB/TC); fall back to 64 MiB.
    try:
        info = pltpu.get_tpu_info()
        cap = getattr(info, "vmem_capacity_bytes", None)
        if cap:
            return int(cap)
    except Exception:
        pass
    return default


def _supports_buffered():
    try:
        pl.BlockSpec((8, 128), lambda i: (0, 0), pipeline_mode=pl.Buffered(1))
        return True
    except Exception:
        return False


_HAS_BUFFERED = _supports_buffered()


def _nbytes(a):
    return int(a.size) * jnp.dtype(a.dtype).itemsize


def _build_call(rows, row_tile, I, H, out_dtype, eps, single_buffer_consts,
                vmem_limit_bytes, cost):
    kernel = functools.partial(convbert_output_kernel, eps=eps, inv_h=1.0 / H)
    const_kwargs = (dict(pipeline_mode=pl.Buffered(1))
                    if single_buffer_consts else {})
    grid_spec = pl.GridSpec(
        grid=(pl.cdiv(rows, row_tile),),
        in_specs=[
            pl.BlockSpec((row_tile, I), lambda i: (i, 0)),             # x tile
            pl.BlockSpec((I, H), lambda i: (0, 0), **const_kwargs),    # weight
            pl.BlockSpec((8, H), lambda i: (0, 0), **const_kwargs),    # params
            pl.BlockSpec((row_tile, H), lambda i: (i, 0)),             # residual
        ],
        out_specs=pl.BlockSpec((row_tile, H), lambda i: (i, 0)),
    )
    return pl.pallas_call(
        kernel,
        out_shape=jax.ShapeDtypeStruct((rows, H), out_dtype),
        grid_spec=grid_spec,
        compiler_params=pltpu.CompilerParams(
            dimension_semantics=("parallel",),
            vmem_limit_bytes=vmem_limit_bytes),
        cost_estimate=cost,
    )


def convbert_output(hidden_states, input_tensor, w_t, bias, gamma, beta,
                    *, eps=1e-12, row_tile=512):
    """hidden_states: (B, S, I); input_tensor: (B, S, H); w_t: (I, H)."""
    B, S, I = hidden_states.shape
    H = input_tensor.shape[-1]
    rows = B * S
    out_dtype = input_tensor.dtype

    # MXU operands in bf16 (deterministic full-rate MXU, half the HBM traffic
    # for the dominant x stream); residual + epilogue stay f32.
    x2 = hidden_states.reshape(rows, I)
    if x2.dtype == jnp.float32:
        x2 = x2.astype(jnp.bfloat16)
    w2 = w_t
    if w2.dtype == jnp.float32:
        w2 = w2.astype(jnp.bfloat16)
    r2 = input_tensor.reshape(rows, H)

    # bias / gamma / beta packed into one (8, H) f32 block (one DMA,
    # full-sublane vregs). Rows 3..7 are padding.
    params = jnp.concatenate(
        [bias.reshape(1, H), gamma.reshape(1, H), beta.reshape(1, H)],
        axis=0).astype(jnp.float32)
    params = jnp.pad(params, ((0, 5), (0, 0)))

    # ---- Row-tile selection (no padding of x/residual; partial last block).
    if rows <= 8:
        row_tile = rows
    else:
        row_tile = max(8, (min(row_tile, rows) // 8) * 8)
        # Ensure >= 2 row tiles so both v7x TensorCores get work.
        if pl.cdiv(rows, row_tile) < 2:
            row_tile = max(8, ((pl.cdiv(rows, 2) + 7) // 8) * 8)

    vmem_cap = _vmem_capacity_bytes()

    def est_bytes(rt):
        # single-buffered weight + params, double-buffered streamed tiles.
        return (_nbytes(w2) + _nbytes(params)
                + 2 * rt * I * jnp.dtype(x2.dtype).itemsize
                + 2 * rt * H * jnp.dtype(r2.dtype).itemsize
                + 2 * rt * H * jnp.dtype(out_dtype).itemsize)

    # Shrink the row tile if the working set would blow the VMEM budget.
    while row_tile > 64 and est_bytes(row_tile) > int(0.8 * vmem_cap):
        row_tile = max(64, ((row_tile // 2) // 8) * 8)

    vmem_limit_bytes = int(min(max(est_bytes(row_tile) + (8 << 20), 32 << 20),
                               vmem_cap))

    out_bpe = jnp.dtype(out_dtype).itemsize
    cost = pl.CostEstimate(
        flops=2 * rows * I * H,
        transcendentals=rows,
        bytes_accessed=(_nbytes(x2) + _nbytes(r2) + _nbytes(w2)
                        + _nbytes(params) + rows * H * out_bpe),
    )

    args = (x2, w2, params, r2)
    if _HAS_BUFFERED:
        try:
            out2 = _build_call(rows, row_tile, I, H, out_dtype, eps,
                               True, vmem_limit_bytes, cost)(*args)
        except pltpu.LoweringException:
            # This Mosaic build rejects single-buffered constants; use default
            # double-buffering for the weight / param block.
            out2 = _build_call(rows, row_tile, I, H, out_dtype, eps,
                               False, vmem_limit_bytes, cost)(*args)
    else:
        out2 = _build_call(rows, row_tile, I, H, out_dtype, eps,
                           False, vmem_limit_bytes, cost)(*args)

    return out2.reshape(B, S, H)


def reference(hidden_states, input_tensor, w_t, bias, gamma, beta, eps=1e-12):
    h = jnp.einsum("bsi,ih->bsh", hidden_states, w_t,
                   precision=jax.lax.Precision.HIGHEST) + bias
    y = h + input_tensor
    mean = jnp.mean(y, axis=-1, keepdims=True)
    var = jnp.mean(jnp.square(y - mean), axis=-1, keepdims=True)
    return (y - mean) * jax.lax.rsqrt(var + eps) * gamma + beta


if __name__ == "__main__":
    # Small (but lane-aligned) config: batch=2, seq=8, hidden=128, intermediate=256.
    B, S, H, I = 2, 8, 128, 256
    eps = 1e-12

    key = jax.random.PRNGKey(0)
    k1, k2, k3, k4, k5 = jax.random.split(key, 5)

    hidden_states = jax.random.normal(k1, (B, S, I), dtype=jnp.float32)
    input_tensor = jax.random.normal(k2, (B, S, H), dtype=jnp.float32)

    # nn.Linear(I, H): weight (H, I), bias (H,). Store transposed (I, H).
    w = jax.random.normal(k3, (H, I), dtype=jnp.float32) * 0.02
    w_t = w.T
    bias = jax.random.normal(k4, (H,), dtype=jnp.float32) * 0.02
    # nn.LayerNorm(H): gamma=1, beta=0 by default; perturb for a real test.
    gamma = 1.0 + 0.1 * jax.random.normal(k5, (H,), dtype=jnp.float32)
    beta = 0.05 * jnp.ones((H,), dtype=jnp.float32)

    out = convbert_output(hidden_states, input_tensor, w_t, bias, gamma, beta,
                          eps=eps)
    out = jax.block_until_ready(out)
    assert out.shape == (B, S, H)

    # Apples-to-apples reference: same bf16-quantized MXU operands, full f32
    # matmul + epilogue math.  Kernel math should match tightly.
    hs_q = hidden_states.astype(jnp.bfloat16).astype(jnp.float32)
    w_q = w_t.astype(jnp.bfloat16).astype(jnp.float32)
    ref_q = reference(hs_q, input_tensor, w_q, bias, gamma, beta, eps)
    assert jnp.allclose(out, ref_q, atol=2e-3, rtol=2e-3), \
        "mismatch vs bf16-operand reference"

    # Sanity check against the full-f32 reference (bf16 operand rounding only).
    ref_f32 = reference(hidden_states, input_tensor, w_t, bias, gamma, beta, eps)
    assert jnp.allclose(out, ref_f32, atol=3e-2, rtol=3e-2), \
        "mismatch vs f32 reference"

    print("KERNEL_OK")
</pallas_src>

<mosaic_0001>
module attributes {stable_mosaic.version = 11 : i64} {
  func.func @convbert_output_kernel(%arg0: i32, %arg1: memref<8x256xbf16, #tpu.memory_space<vmem>>, %arg2: memref<256x128xbf16, #tpu.memory_space<vmem>>, %arg3: memref<8x128xf32, #tpu.memory_space<vmem>>, %arg4: memref<8x128xf32, #tpu.memory_space<vmem>>, %arg5: memref<8x128xf32, #tpu.memory_space<vmem>>) attributes {dimension_semantics = [#tpu.dimension_semantics<parallel>], iteration_bounds = array<i64: 2>, scalar_prefetch = 0 : i64, scratch_operands = 0 : i64, tpu.core_type = #tpu.core_type<tc>, window_params = [{transform_indices = @transform_0, window_bounds = array<i64: 8, 256>}, {pipeline_mode = #tpu.pipeline_mode<synchronous>, transform_indices = @transform_1, window_bounds = array<i64: 256, 128>}, {pipeline_mode = #tpu.pipeline_mode<synchronous>, transform_indices = @transform_2, window_bounds = array<i64: 8, 128>}, {transform_indices = @transform_3, window_bounds = array<i64: 8, 128>}, {transform_indices = @transform_4, window_bounds = array<i64: 8, 128>}]} {
    %c0 = arith.constant 0 : index
    %c0_0 = arith.constant 0 : index
    %0 = vector.load %arg1[%c0, %c0_0] : memref<8x256xbf16, #tpu.memory_space<vmem>>, vector<8x256xbf16>
    %c0_1 = arith.constant 0 : index
    %c0_2 = arith.constant 0 : index
    %1 = vector.load %arg2[%c0_1, %c0_2] : memref<256x128xbf16, #tpu.memory_space<vmem>>, vector<256x128xbf16>
    %cst = arith.constant dense<0.000000e+00> : vector<8x128xf32>
    %2 = tpu.matmul %0, %1, %cst {dimension_numbers = #tpu.dot_dimension_numbers<[1], [0], [0], [1], [0, 0, 1, 1], [], []>} : vector<8x256xbf16>, vector<256x128xbf16>, vector<8x128xf32> -> vector<8x128xf32>
    %c0_3 = arith.constant 0 : index
    %c0_4 = arith.constant 0 : index
    %3 = vector.load %arg3[%c0_3, %c0_4] : memref<8x128xf32, #tpu.memory_space<vmem>>, vector<8x128xf32>
    %4 = vector.extract_strided_slice %3 {offsets = [0, 0], sizes = [1, 128], strides = [1, 1]} : vector<8x128xf32> to vector<1x128xf32>
    %5 = vector.extract_strided_slice %3 {offsets = [1, 0], sizes = [1, 128], strides = [1, 1]} : vector<8x128xf32> to vector<1x128xf32>
    %6 = vector.extract_strided_slice %3 {offsets = [2, 0], sizes = [1, 128], strides = [1, 1]} : vector<8x128xf32> to vector<1x128xf32>
    %7 = vector.broadcast %4 : vector<1x128xf32> to vector<8x128xf32>
    %8 = arith.addf %2, %7 : vector<8x128xf32>
    %c0_5 = arith.constant 0 : index
    %c0_6 = arith.constant 0 : index
    %9 = vector.load %arg4[%c0_5, %c0_6] : memref<8x128xf32, #tpu.memory_space<vmem>>, vector<8x128xf32>
    %10 = arith.addf %8, %9 : vector<8x128xf32>
    %cst_7 = arith.constant dense<0.000000e+00> : vector<8xf32>
    %11 = vector.multi_reduction <add>, %10, %cst_7 [1] : vector<8x128xf32> to vector<8xf32>
    %12 = vector.shape_cast %11 : vector<8xf32> to vector<8x1xf32>
    %cst_8 = arith.constant 7.812500e-03 : f32
    %13 = vector.broadcast %cst_8 : f32 to vector<8x1xf32>
    %14 = arith.mulf %12, %13 : vector<8x1xf32>
    %15 = vector.broadcast %14 : vector<8x1xf32> to vector<8x128xf32>
    %16 = arith.subf %10, %15 : vector<8x128xf32>
    %17 = arith.mulf %16, %16 : vector<8x128xf32>
    %cst_9 = arith.constant dense<0.000000e+00> : vector<8xf32>
    %18 = vector.multi_reduction <add>, %17, %cst_9 [1] : vector<8x128xf32> to vector<8xf32>
    %19 = vector.shape_cast %18 : vector<8xf32> to vector<8x1xf32>
    %cst_10 = arith.constant 7.812500e-03 : f32
    %20 = vector.broadcast %cst_10 : f32 to vector<8x1xf32>
    %21 = arith.mulf %19, %20 : vector<8x1xf32>
    %cst_11 = arith.constant 9.99999996E-13 : f32
    %22 = vector.broadcast %cst_11 : f32 to vector<8x1xf32>
    %23 = arith.addf %21, %22 : vector<8x1xf32>
    %24 = math.rsqrt %23 : vector<8x1xf32>
    %25 = vector.broadcast %24 : vector<8x1xf32> to vector<8x128xf32>
    %26 = arith.mulf %16, %25 : vector<8x128xf32>
    %27 = vector.broadcast %5 : vector<1x128xf32> to vector<8x128xf32>
    %28 = arith.mulf %26, %27 : vector<8x128xf32>
    %29 = vector.broadcast %6 : vector<1x128xf32> to vector<8x128xf32>
    %30 = arith.addf %28, %29 : vector<8x128xf32>
    %c0_12 = arith.constant 0 : index
    %c0_13 = arith.constant 0 : index
    %31 = vector.load %arg5[%c0_12, %c0_13] : memref<8x128xf32, #tpu.memory_space<vmem>>, vector<8x128xf32>
    tpu.vector_store %arg5[%c0_12, %c0_13], %30 {strides = array<i32>} : memref<8x128xf32, #tpu.memory_space<vmem>>, vector<8x128xf32>,
    return
  }
  func.func @transform_0(%arg0: i32) -> (i32, i32) {
    %c0_i32 = arith.constant 0 : i32
    %c0_i32_0 = arith.constant 0 : i32
    return %arg0, %c0_i32 : i32, i32
  }
  func.func @transform_1(%arg0: i32) -> (i32, i32) {
    %c0_i32 = arith.constant 0 : i32
    %c0_i32_0 = arith.constant 0 : i32
    %c0_i32_1 = arith.constant 0 : i32
    return %c0_i32, %c0_i32_0 : i32, i32
  }
  func.func @transform_2(%arg0: i32) -> (i32, i32) {
    %c0_i32 = arith.constant 0 : i32
    %c0_i32_0 = arith.constant 0 : i32
    %c0_i32_1 = arith.constant 0 : i32
    return %c0_i32, %c0_i32_0 : i32, i32
  }
  func.func @transform_3(%arg0: i32) -> (i32, i32) {
    %c0_i32 = arith.constant 0 : i32
    %c0_i32_0 = arith.constant 0 : i32
    return %arg0, %c0_i32 : i32, i32
  }
  func.func @transform_4(%arg0: i32) -> (i32, i32) {
    %c0_i32 = arith.constant 0 : i32
    %c0_i32_0 = arith.constant 0 : i32
    return %arg0, %c0_i32 : i32, i32
  }
}

</mosaic_0001>

<llo_original>
// kernel: tpu_custom_call.1
$region0: #{tpu_custom_call.1}
  #allocation0 [shape = 'u32[]', space=smem, size = 0x4, offset = 0x4, fixed_abs, tag = 'smem constant byte address 0x4 - core index']
  #allocation1 [shape = 'u32[144,128]{1,0:T(1,128)}', space=vmem, size = 0x12000, scoped, tag = 'internal scratch']
  %s0 = inlined_call_operand.hbm [shape: bf16[16,256], index: 0, kind: input, shape index: {}]
  %s1 = inlined_call_operand.hbm [shape: bf16[256,128], index: 1, kind: input, shape index: {}]
  %s2 = inlined_call_operand.hbm [shape: f32[8,128], index: 2, kind: input, shape index: {}]
  %s3 = inlined_call_operand.hbm [shape: f32[16,128], index: 3, kind: input, shape index: {}]
  %s4 = inlined_call_operand.hbm [shape: f32[16,128], index: 4, kind: output, shape index: {}]
  %s5 = sld [smem:[#allocation0]]
  $region65: #{tpu_custom_call.1} parent=0
    _
  %s7 = ssub.s32 1, %s5
  %s8 = scalar_select 0, %s7, %s5
  $region1: #{tpu_custom_call.1} parent=0
    #allocation2 [shape = 'u8[8192]{0}', space=vmem, size = 0x2000, scoped, tag = 'input window, operand 0']
    #allocation3 [shape = 's32[2]{0}', space=sflag, size = 0x8, scoped, tag = 'scoped memory for tpu_custom_call.1']
    #allocation4 [shape = 's32[2]{0}', space=sflag, size = 0x8, scoped, tag = 'scoped memory for tpu_custom_call.1']
    #allocation5 [shape = 'u8[65536]{0}', space=vmem, size = 0x10000, scoped, tag = 'input window, operand 1, single buffered']
    #allocation6 [shape = 's32[1]{0}', space=sflag, size = 0x4, scoped, tag = 'scoped memory for tpu_custom_call.1']
    #allocation7 [shape = 'u8[4096]{0}', space=vmem, size = 0x1000, scoped, tag = 'input window, operand 2, single buffered']
    #allocation8 [shape = 'u8[8192]{0}', space=vmem, size = 0x2000, scoped, tag = 'input window, operand 3']
    #allocation9 [shape = 's32[2]{0}', space=sflag, size = 0x8, scoped, tag = 'scoped memory for tpu_custom_call.1']
    #allocation10 [shape = 'u8[8192]{0}', space=vmem, size = 0x2000, scoped, tag = 'output window, operand 0']
    %9 = vsyncpa [#allocation3], 0
    %s10 = scalar_lea.sflag [#allocation3], 1
    %11 = vsyncpa %s10, 0
    %12 = vsyncpa [#allocation6], 0
    %13 = vsyncpa [#allocation9], 0
    %s14 = scalar_lea.sflag [#allocation9], 1
    %15 = vsyncpa %s14, 0
    %16 = vsyncpa [#allocation4], 0
    %s17 = scalar_lea.sflag [#allocation4], 1
    %18 = vsyncpa %s17, 0
    loop: start=0, step=1, limit=4
    $region2: #{tpu_custom_call.1} parent=1 // loop_pre_header
      _
    $region3: #{tpu_custom_call.1} parent=1 // loop_header
      %s20 = sphi 0, %s24
      %p21 = scmp.ge.s32.totalorder %s20, 4
      %s30 = sphi 0, %s32
      %s33 = sphi 0, %s30
      %s34 = sphi 0, %s33
      %s50 = sphi 0, %s34
      %s54 = sphi 0, %s54
      %s56 = sphi 0, %s54
      %s57 = sphi 0, %s56
      %s71 = sphi 0, %s57
      %s75 = sphi 0, %s75
      %s77 = sphi 0, %s75
      %s78 = sphi 0, %s77
      %s92 = sphi 0, %s78
      %s98 = sphi 0, %s100
      %s101 = sphi 0, %s98
      %s102 = sphi 0, %s101
      %s118 = sphi 0, %s102
      %s124 = sphi 0, %s126
      %s127 = sphi 0, %s124
      %s128 = sphi 0, %s127
      %s144 = sphi 0, %s128
    $region4: #{tpu_custom_call.1} parent=1 // loop_header_branch
      %23 = sbr.rel (%p21) target = $region8
    $region5: #{tpu_custom_call.1} parent=1 // loop_body
      %s25 = ssub.s32 %s20, 1
      %s26 = ssub.s32 %s20, 2
      %s27 = sadd.s32 %s20, 1
      %s28 = ssub.s32 %s20, %s27
      %p29 = scmp.eq.s32.totalorder %s28, 0
      %s31 = sadd.s32 %s30, 1
      %s32 = scalar_select %p29, %s30, %s31
      %p35 = pneg %p29
      %p36 = scmp.eq.s32.totalorder %s20, 1
      %p37 = por %p35, %p36
      %p38 = scmp.ne.s32.totalorder %s30, %s33
      %p39 = scmp.eq.s32.totalorder %s20, 0
      %p40 = por %p38, %p39
      %p41 = scmp.ne.s32.totalorder %s30, %s33
      %p42 = scmp.eq.s32.totalorder %s25, 1
      %p43 = por %p41, %p42
      %p44 = scmp.ne.s32.totalorder %s33, %s34
      %p45 = scmp.eq.s32.totalorder %s25, 0
      %p46 = por %p44, %p45
      %p47 = scmp.ne.s32.totalorder %s33, %s34
      %p48 = scmp.eq.s32.totalorder %s26, 1
      %p49 = por %p47, %p48
      %p51 = scmp.ne.s32.totalorder %s34, %s50
      %p52 = scmp.eq.s32.totalorder %s26, 0
      %p53 = por %p51, %p52
      %s55 = sadd.s32 %s54, 1
      %p58 = scmp.eq.s32.totalorder %s20, 1
      %p59 = scmp.ne.s32.totalorder %s54, %s56
      %p60 = scmp.eq.s32.totalorder %s20, 0
      %p61 = por %p59, %p60
      %p62 = scmp.ne.s32.totalorder %s54, %s56
      %p63 = scmp.eq.s32.totalorder %s25, 1
      %p64 = por %p62, %p63
      %p65 = scmp.ne.s32.totalorder %s56, %s57
      %p66 = scmp.eq.s32.totalorder %s25, 0
      %p67 = por %p65, %p66
      %p68 = scmp.ne.s32.totalorder %s56, %s57
      %p69 = scmp.eq.s32.totalorder %s26, 1
      %p70 = por %p68, %p69
      %p72 = scmp.ne.s32.totalorder %s57, %s71
      %p73 = scmp.eq.s32.totalorder %s26, 0
      %p74 = por %p72, %p73
      %s76 = sadd.s32 %s75, 1
      %p79 = scmp.eq.s32.totalorder %s20, 1
      %p80 = scmp.ne.s32.totalorder %s75, %s77
      %p81 = scmp.eq.s32.totalorder %s20, 0
      %p82 = por %p80, %p81
      %p83 = scmp.ne.s32.totalorder %s75, %s77
      %p84 = scmp.eq.s32.totalorder %s25, 1
      %p85 = por %p83, %p84
      %p86 = scmp.ne.s32.totalorder %s77, %s78
      %p87 = scmp.eq.s32.totalorder %s25, 0
      %p88 = por %p86, %p87
      %p89 = scmp.ne.s32.totalorder %s77, %s78
      %p90 = scmp.eq.s32.totalorder %s26, 1
      %p91 = por %p89, %p90
      %p93 = scmp.ne.s32.totalorder %s78, %s92
      %p94 = scmp.eq.s32.totalorder %s26, 0
      %p95 = por %p93, %p94
      %s96 = ssub.s32 %s20, %s27
      %p97 = scmp.eq.s32.totalorder %s96, 0
      %s99 = sadd.s32 %s98, 1
      %s100 = scalar_select %p97, %s98, %s99
      %p103 = pneg %p97
      %p104 = scmp.eq.s32.totalorder %s20, 1
      %p105 = por %p103, %p104
      %p106 = scmp.ne.s32.totalorder %s98, %s101
      %p107 = scmp.eq.s32.totalorder %s20, 0
      %p108 = por %p106, %p107
      %p109 = scmp.ne.s32.totalorder %s98, %s101
      %p110 = scmp.eq.s32.totalorder %s25, 1
      %p111 = por %p109, %p110
      %p112 = scmp.ne.s32.totalorder %s101, %s102
      %p113 = scmp.eq.s32.totalorder %s25, 0
      %p114 = por %p112, %p113
      %p115 = scmp.ne.s32.totalorder %s101, %s102
      %p116 = scmp.eq.s32.totalorder %s26, 1
      %p117 = por %p115, %p116
      %p119 = scmp.ne.s32.totalorder %s102, %s118
      %p120 = scmp.eq.s32.totalorder %s26, 0
      %p121 = por %p119, %p120
      %s122 = ssub.s32 %s20, %s27
      %p123 = scmp.eq.s32.totalorder %s122, 0
      %s125 = sadd.s32 %s124, 1
      %s126 = scalar_select %p123, %s124, %s125
      %p129 = pneg %p123
      %p130 = scmp.eq.s32.totalorder %s20, 1
      %p131 = por %p129, %p130
      %p132 = scmp.ne.s32.totalorder %s124, %s127
      %p133 = scmp.eq.s32.totalorder %s20, 0
      %p134 = por %p132, %p133
      %p135 = scmp.ne.s32.totalorder %s124, %s127
      %p136 = scmp.eq.s32.totalorder %s25, 1
      %p137 = por %p135, %p136
      %p138 = scmp.ne.s32.totalorder %s127, %s128
      %p139 = scmp.eq.s32.totalorder %s25, 0
      %p140 = por %p138, %p139
      %p141 = scmp.ne.s32.totalorder %s127, %s128
      %p142 = scmp.eq.s32.totalorder %s26, 1
      %p143 = por %p141, %p142
      %p145 = scmp.ne.s32.totalorder %s128, %s144
      %p146 = scmp.eq.s32.totalorder %s26, 0
      %p147 = por %p145, %p146
      %p148 = scmp.le.s32.totalorder 1, %s20
      %p149 = scmp.lt.s32.totalorder %s20, 3
      %p150 = pnand %p148, %p149
      %p151 = pneg %p150
      // Predicated region
      $region9: #{tpu_custom_call.1} parent=5 // pred_check
        _
      $region10: #{tpu_custom_call.1} parent=5 // pred_check_branch
        %153 = sbr.rel (%p150) target = $region12
      $region11: #{tpu_custom_call.1} parent=5 // pred_region
        %s154 = ssub.s32 %s20, 1
        // Predicated region
        $region13: #{tpu_custom_call.1} parent=11 // pred_check
          %p155 = pneg %p67
        $region14: #{tpu_custom_call.1} parent=11 // pred_check_branch
          %157 = sbr.rel (%p155) target = $region16
        $region15: #{tpu_custom_call.1} parent=11 // pred_region
          %s159 = ssub.s32 2048, 2048
          %160 = vsyncadd [#allocation6], %s159
          %s161 = sshll.u32 [#allocation5], 4
          %s162 = int_to_ptr.vmem [resolvable:$true] %s161
          %167 = dma.hbm_to_vmem [thread:$0]  %s1, 2048, %s162, [#allocation6], 64, 64, 4
        $region16: #{tpu_custom_call.1} parent=11 // pred_fallthru
          _
        // Predicated region
        $region17: #{tpu_custom_call.1} parent=11 // pred_check
          %p168 = pneg %p88
        $region18: #{tpu_custom_call.1} parent=11 // pred_check_branch
          %170 = sbr.rel (%p168) target = $region20
        $region19: #{tpu_custom_call.1} parent=11 // pred_region
          %s172 = ssub.s32 128, 128
          %173 = vsyncadd [#allocation6], %s172
          %s175 = sshll.u32 [#allocation7], 4
          %s176 = int_to_ptr.vmem [resolvable:$true] %s175
          %178 = dma.hbm_to_vmem [thread:$0]  %s2, 128, %s176, [#allocation6]
        $region20: #{tpu_custom_call.1} parent=11 // pred_fallthru
          _
      $region12: #{tpu_custom_call.1} parent=5 // pred_fallthru
        _
      %p179 = scmp.lt.s32.totalorder %s20, 2
      // Predicated region
      $region21: #{tpu_custom_call.1} parent=5 // pred_check
        %p180 = pneg %p179
      $region22: #{tpu_custom_call.1} parent=5 // pred_check_branch
        %182 = sbr.rel (%p180) target = $region24
      $region23: #{tpu_custom_call.1} parent=5 // pred_region
        // Predicated region
        $region25: #{tpu_custom_call.1} parent=23 // pred_check
          %p183 = pneg %p40
        $region26: #{tpu_custom_call.1} parent=23 // pred_check_branch
          %185 = sbr.rel (%p183) target = $region28
        $region27: #{tpu_custom_call.1} parent=23 // pred_region
          %s186 = sand.u32 %s30, 1
          %s187 = scalar_lea.sflag [#allocation3], %s186
          %s188 = sand.u32 %s30, 1
          %s189 = smul.addr %s188, 8
          %s190 = scalar_lea.vmem [#allocation2], %s189
          %s192 = ssub.s32 128, 128
          %193 = vsyncadd %s187, %s192
          %s194 = smul.addr %s20, 2
          %s195 = smul.addr %s194, 64
          %s196 = scalar_lea.hbm %s0, %s195
          %s198 = sshll.u32 %s190, 4
          %s199 = int_to_ptr.vmem [resolvable:$true] %s198
          %201 = dma.hbm_to_vmem [thread:$0]  %s196, 128, %s199, %s187
        $region28: #{tpu_custom_call.1} parent=23 // pred_fallthru
          _
        // Predicated region
        $region29: #{tpu_custom_call.1} parent=23 // pred_check
          %p202 = pneg %p108
        $region30: #{tpu_custom_call.1} parent=23 // pred_check_branch
          %204 = sbr.rel (%p202) target = $region32
        $region31: #{tpu_custom_call.1} parent=23 // pred_region
          %s205 = sand.u32 %s98, 1
          %s206 = scalar_lea.sflag [#allocation9], %s205
          %s207 = sand.u32 %s98, 1
          %s208 = smul.addr %s207, 8
          %s209 = scalar_lea.vmem [#allocation8], %s208
          %s211 = ssub.s32 128, 128
          %212 = vsyncadd %s206, %s211
          %s213 = smul.addr %s20, 128
          %s214 = scalar_lea.hbm %s3, %s213
          %s216 = sshll.u32 %s209, 4
          %s217 = int_to_ptr.vmem [resolvable:$true] %s216
          %219 = dma.hbm_to_vmem [thread:$0]  %s214, 128, %s217, %s206
        $region32: #{tpu_custom_call.1} parent=23 // pred_fallthru
          _
      $region24: #{tpu_custom_call.1} parent=5 // pred_fallthru
        _
      %p220 = scmp.le.s32.totalorder 1, %s20
      %p221 = scmp.lt.s32.totalorder %s20, 3
      %p222 = pnand %p220, %p221
      %p223 = pneg %p222
      // Predicated region
      $region33: #{tpu_custom_call.1} parent=5 // pred_check
        _
      $region34: #{tpu_custom_call.1} parent=5 // pred_check_branch
        %225 = sbr.rel (%p222) target = $region36
      $region35: #{tpu_custom_call.1} parent=5 // pred_region
        %s226 = ssub.s32 %s20, 1
        %s227 = sand.u32 %s33, 1
        %s228 = scalar_lea.sflag [#allocation3], %s227
        %s229 = sand.u32 %s33, 1
        %s230 = smul.addr %s229, 8
        %s231 = scalar_lea.vmem [#allocation2], %s230
        // Predicated region
        $region37: #{tpu_custom_call.1} parent=35 // pred_check
          %p232 = pneg %p46
        $region38: #{tpu_custom_call.1} parent=35 // pred_check_branch
          %234 = sbr.rel (%p232) target = $region40
        $region39: #{tpu_custom_call.1} parent=35 // pred_region
          %235 = dma.done %s228, 128
        $region40: #{tpu_custom_call.1} parent=35 // pred_fallthru
          _
        // Predicated region
        $region41: #{tpu_custom_call.1} parent=35 // pred_check
          %p236 = pneg %p67
        $region42: #{tpu_custom_call.1} parent=35 // pred_check_branch
          %238 = sbr.rel (%p236) target = $region44
        $region43: #{tpu_custom_call.1} parent=35 // pred_region
          %239 = dma.done [#allocation6], 2048
        $region44: #{tpu_custom_call.1} parent=35 // pred_fallthru
          _
        // Predicated region
        $region45: #{tpu_custom_call.1} parent=35 // pred_check
          %p240 = pneg %p88
        $region46: #{tpu_custom_call.1} parent=35 // pred_check_branch
          %242 = sbr.rel (%p240) target = $region48
        $region47: #{tpu_custom_call.1} parent=35 // pred_region
          %243 = dma.done [#allocation6], 128
        $region48: #{tpu_custom_call.1} parent=35 // pred_fallthru
          _
        %s244 = sand.u32 %s101, 1
        %s245 = scalar_lea.sflag [#allocation9], %s244
        %s246 = sand.u32 %s101, 1
        %s247 = smul.addr %s246, 8
        %s248 = scalar_lea.vmem [#allocation8], %s247
        // Predicated region
        $region49: #{tpu_custom_call.1} parent=35 // pred_check
          %p249 = pneg %p114
        $region50: #{tpu_custom_call.1} parent=35 // pred_check_branch
          %251 = sbr.rel (%p249) target = $region52
        $region51: #{tpu_custom_call.1} parent=35 // pred_region
          %252 = dma.done %s245, 128
        $region52: #{tpu_custom_call.1} parent=35 // pred_fallthru
          _
        %s253 = sand.u32 %s33, 1
        %s254 = scalar_lea.sflag [#allocation3], %s253
        %s255 = sand.u32 %s33, 1
        %s256 = smul.addr %s255, 8
        %s257 = scalar_lea.vmem [#allocation2], %s256
        %p258 = pneg %p46
        %p259 = pneg %p43
        %p260 = pneg %p67
        %p261 = pneg %p64
        %p262 = pneg %p88
        %p263 = pneg %p85
        %s264 = sand.u32 %s101, 1
        %s265 = scalar_lea.sflag [#allocation9], %s264
        %s266 = sand.u32 %s101, 1
        %s267 = smul.addr %s266, 8
        %s268 = scalar_lea.vmem [#allocation8], %s267
        %p269 = pneg %p114
        %p270 = pneg %p111
        %p271 = pneg %p140
        %p272 = pneg %p137
        %s273 = sand.u32 %s127, 1
        %s274 = scalar_lea.sflag [#allocation4], %s273
        %s275 = sand.u32 %s127, 1
        %s276 = smul.addr %s275, 8
        %s277 = scalar_lea.vmem [#allocation10], %s276
        %v279 = vld [vmem:[%s231] sm:$0xff]
        %v280 = vld [vmem:[#allocation5] sm:$0xf]
        %v281 = vld [vmem:[#allocation5 + $0x4] sm:$0xf]
        %v282 = vld [vmem:[#allocation5 + $0x8] sm:$0xf]
        %v283 = vld [vmem:[#allocation5 + $0xc] sm:$0xf]
        %v284 = vld [vmem:[#allocation5 + $0x10] sm:$0xf]
        %v285 = vld [vmem:[#allocation5 + $0x14] sm:$0xf]
        %v286 = vld [vmem:[#allocation5 + $0x18] sm:$0xf]
        %v287 = vld [vmem:[#allocation5 + $0x1c] sm:$0xf]
        %v288 = vld [vmem:[#allocation5 + $0x20] sm:$0xf]
        %v289 = vld [vmem:[#allocation5 + $0x24] sm:$0xf]
        %v290 = vld [vmem:[#allocation5 + $0x28] sm:$0xf]
        %v291 = vld [vmem:[#allocation5 + $0x2c] sm:$0xf]
        %v292 = vld [vmem:[#allocation5 + $0x30] sm:$0xf]
        %v293 = vld [vmem:[#allocation5 + $0x34] sm:$0xf]
        %v294 = vld [vmem:[#allocation5 + $0x38] sm:$0xf]
        %v295 = vld [vmem:[#allocation5 + $0x3c] sm:$0xf]
        %v296 = vld [vmem:[#allocation5 + $0x40] sm:$0xf]
        %v297 = vld [vmem:[#allocation5 + $0x44] sm:$0xf]
        %v298 = vld [vmem:[#allocation5 + $0x48] sm:$0xf]
        %v299 = vld [vmem:[#allocation5 + $0x4c] sm:$0xf]
        %v300 = vld [vmem:[#allocation5 + $0x50] sm:$0xf]
        %v301 = vld [vmem:[#allocation5 + $0x54] sm:$0xf]
        %v302 = vld [vmem:[#allocation5 + $0x58] sm:$0xf]
        %v303 = vld [vmem:[#allocation5 + $0x5c] sm:$0xf]
        %v304 = vld [vmem:[#allocation5 + $0x60] sm:$0xf]
        %v305 = vld [vmem:[#allocation5 + $0x64] sm:$0xf]
        %v306 = vld [vmem:[#allocation5 + $0x68] sm:$0xf]
        %v307 = vld [vmem:[#allocation5 + $0x6c] sm:$0xf]
        %v308 = vld [vmem:[#allocation5 + $0x70] sm:$0xf]
        %v309 = vld [vmem:[#allocation5 + $0x74] sm:$0xf]
        %v310 = vld [vmem:[#allocation5 + $0x78] sm:$0xf]
        %v311 = vld [vmem:[#allocation5 + $0x7c] sm:$0xf]
        %v312 = vld [vmem:[#allocation7] sm:$0xff]
        %v313 = vlaneseq
        %v314 = vshrl.u32 %v313, 7
        %v315 = vsub.s32 0, %v314
        %v316 = vrot.slane %v312, %v315
        %v318 = vunpack.c.l.b16 %v279
        %v319 = vunpack.c.h.b16 %v279
        %v320 = vpack.c.b16 %v318, %v318
        %v321 = vpack.c.b16 %v319, %v319
        %v356 = vunpack.c.l.b16 %v280
        %v357 = vunpack.c.l.b16 %v281
        %v358 = vunpack.c.l.b16 %v282
        %v359 = vunpack.c.l.b16 %v283
        %v360 = vunpack.c.l.b16 %v284
        %v361 = vunpack.c.l.b16 %v285
        %v362 = vunpack.c.l.b16 %v286
        %v363 = vunpack.c.l.b16 %v287
        %v364 = vunpack.c.l.b16 %v288
        %v365 = vunpack.c.l.b16 %v289
        %v366 = vunpack.c.l.b16 %v290
        %v367 = vunpack.c.l.b16 %v291
        %v368 = vunpack.c.l.b16 %v292
        %v369 = vunpack.c.l.b16 %v293
        %v370 = vunpack.c.l.b16 %v294
        %v371 = vunpack.c.l.b16 %v295
        %v372 = vunpack.c.l.b16 %v296
        %v373 = vunpack.c.l.b16 %v297
        %v374 = vunpack.c.l.b16 %v298
        %v375 = vunpack.c.l.b16 %v299
        %v376 = vunpack.c.l.b16 %v300
        %v377 = vunpack.c.l.b16 %v301
        %v378 = vunpack.c.l.b16 %v302
        %v379 = vunpack.c.l.b16 %v303
        %v380 = vunpack.c.l.b16 %v304
        %v381 = vunpack.c.l.b16 %v305
        %v382 = vunpack.c.l.b16 %v306
        %v383 = vunpack.c.l.b16 %v307
        %v384 = vunpack.c.l.b16 %v308
        %v385 = vunpack.c.l.b16 %v309
        %v386 = vunpack.c.l.b16 %v310
        %v387 = vunpack.c.l.b16 %v311
        %v388 = vpack.c.b16 %v357, %v356
        %v389 = vpack.c.b16 %v359, %v358
        %v390 = vpack.c.b16 %v361, %v360
        %v391 = vpack.c.b16 %v363, %v362
        %v392 = vpack.c.b16 %v365, %v364
        %v393 = vpack.c.b16 %v367, %v366
        %v394 = vpack.c.b16 %v369, %v368
        %v395 = vpack.c.b16 %v371, %v370
        %v396 = vpack.c.b16 %v373, %v372
        %v397 = vpack.c.b16 %v375, %v374
        %v398 = vpack.c.b16 %v377, %v376
        %v399 = vpack.c.b16 %v379, %v378
        %v400 = vpack.c.b16 %v381, %v380
        %v401 = vpack.c.b16 %v383, %v382
        %v402 = vpack.c.b16 %v385, %v384
        %v403 = vpack.c.b16 %v387, %v386
        %420 = vmatprep.subr.bf16.mxu0 0
        %421 = vmatpush1.bf16.msra.mxu0 %v388
        %422 = vmatprep.subr.bf16.mxu0 0
        %423 = vmatpush1.bf16.msra.mxu0 %v389
        %424 = vmatprep.subr.bf16.mxu0 0
        %425 = vmatpush1.bf16.msra.mxu0 %v390
        %426 = vmatprep.subr.bf16.mxu0 0
        %427 = vmatpush1.bf16.msra.mxu0 %v391
        %428 = vmatprep.subr.bf16.mxu0 0
        %429 = vmatpush1.bf16.msra.mxu0 %v392
        %430 = vmatprep.subr.bf16.mxu0 0
        %431 = vmatpush1.bf16.msra.mxu0 %v393
        %432 = vmatprep.subr.bf16.mxu0 0
        %433 = vmatpush1.bf16.msra.mxu0 %v394
        %434 = vmatprep.subr.bf16.mxu0 0
        %435 = vmatpush1.bf16.msra.mxu0 %v395
        %436 = vmatprep.subr.bf16.mxu0 0
        %437 = vmatpush1.bf16.msra.mxu0 %v396
        %438 = vmatprep.subr.bf16.mxu0 0
        %439 = vmatpush1.bf16.msra.mxu0 %v397
        %440 = vmatprep.subr.bf16.mxu0 0
        %441 = vmatpush1.bf16.msra.mxu0 %v398
        %442 = vmatprep.subr.bf16.mxu0 0
        %443 = vmatpush1.bf16.msra.mxu0 %v399
        %444 = vmatprep.subr.bf16.mxu0 0
        %445 = vmatpush1.bf16.msra.mxu0 %v400
        %446 = vmatprep.subr.bf16.mxu0 0
        %447 = vmatpush1.bf16.msra.mxu0 %v401
        %448 = vmatprep.subr.bf16.mxu0 0
        %449 = vmatpush1.bf16.msra.mxu0 %v402
        %450 = vmatprep.subr.bf16.mxu0 0
        %451 = vmatpush1.bf16.msra.mxu0 %v403
        %452 = vmatprep.mubr.bf16.mxu0 %v321
        %453 = vmatmul.mubr.bf16.gmra.mrb[0].mxu0 %v320
        %v454 = vpop.f32.mrb[0].mxu0
        %v455 = vadd.f32 %v316, %v454
        %v456 = vpop.f32.mrb[0].mxu0
        %v457 = vpop.f32.mrb[0].mxu0
        %v458 = vpop.f32.mrb[0].mxu0
        %459 = vdwg.mxu0
        %v460 = vld [vmem:[%s248] sm:$0xff]
        %v461 = vadd.f32 %v455, %v460
        %462 = vadd.xlane.f32.xlu0 %v461
        %v463 = vpop.xlane.xlu0 %462
        %v464 = vmul.f32 %v463, 0.0078125
        %v465 = vsub.f32 %v461, %v464
        %v466 = vmul.f32 %v465, %v465
        %467 = vadd.xlane.f32.xlu0 %v466
        %v468 = vpop.xlane.xlu0 %467
        %v469 = vmul.f32 %v468, 0.0078125
        %v470 = vadd.f32 %v469, 1e-12
        %v471 = vrsqrt.pop %v470
        %v472 = vmul.f32 %v465, %v471
        %v473 = vlaneseq
        %v474 = vshrl.u32 %v473, 7
        %v475 = vsub.s32 1, %v474
        %v476 = vrot.slane %v312, %v475
        %v477 = vmul.f32 %v472, %v476
        %v478 = vlaneseq
        %v479 = vshrl.u32 %v478, 7
        %v480 = vsub.s32 2, %v479
        %v481 = vrot.slane %v312, %v480
        %v482 = vadd.f32 %v477, %v481
        %483 = vst [vmem:[%s277] sm:$0xff] %v482
        %s484 = sand.u32 %s127, 1
        %s485 = scalar_lea.sflag [#allocation4], %s484
        %s486 = sand.u32 %s127, 1
        %s487 = smul.addr %s486, 8
        %s488 = scalar_lea.vmem [#allocation10], %s487
        // Predicated region
        $region53: #{tpu_custom_call.1} parent=35 // pred_check
          %p489 = pneg %p137
        $region54: #{tpu_custom_call.1} parent=35 // pred_check_branch
          %491 = sbr.rel (%p489) target = $region56
        $region55: #{tpu_custom_call.1} parent=35 // pred_region
          %s493 = ssub.s32 128, 128
          %494 = vsyncadd %s485, %s493
          %s495 = smul.addr %s25, 128
          %s496 = scalar_lea.hbm %s4, %s495
          %s498 = sshll.u32 %s488, 4
          %s499 = int_to_ptr.vmem [resolvable:$true] %s498
          %501 = dma.vmem_to_hbm [thread:$0]  %s499, 128, %s496, %s485
        $region56: #{tpu_custom_call.1} parent=35 // pred_fallthru
          _
      $region36: #{tpu_custom_call.1} parent=5 // pred_fallthru
        _
      %p502 = scmp.le.s32.totalorder 2, %s20
      // Predicated region
      $region57: #{tpu_custom_call.1} parent=5 // pred_check
        %p503 = pneg %p502
      $region58: #{tpu_custom_call.1} parent=5 // pred_check_branch
        %505 = sbr.rel (%p503) target = $region60
      $region59: #{tpu_custom_call.1} parent=5 // pred_region
        %s506 = ssub.s32 %s20, 2
        // Predicated region
        $region61: #{tpu_custom_call.1} parent=59 // pred_check
          %p507 = pneg %p143
        $region62: #{tpu_custom_call.1} parent=59 // pred_check_branch
          %509 = sbr.rel (%p507) target = $region64
        $region63: #{tpu_custom_call.1} parent=59 // pred_region
          %s510 = sand.u32 %s128, 1
          %s511 = scalar_lea.sflag [#allocation4], %s510
          %s512 = sand.u32 %s128, 1
          %s513 = smul.addr %s512, 8
          %s514 = scalar_lea.vmem [#allocation10], %s513
          %515 = dma.done %s511, 128
        $region64: #{tpu_custom_call.1} parent=59 // pred_fallthru
          _
      $region60: #{tpu_custom_call.1} parent=5 // pred_fallthru
        _
    $region6: #{tpu_custom_call.1} parent=1 // loop_footer
      %s24 = sadd.s32 1, %s20
    $region7: #{tpu_custom_call.1} parent=1 // loop_footer_branch
      %19 = sbr.rel target = $region3
    $region8: #{tpu_custom_call.1} parent=1 // loop_exit
      _
    %516 = vsyncpa [#allocation3], 1
    %s517 = scalar_lea.sflag [#allocation3], 1
    %518 = vsyncpa %s517, 1
    %519 = vsyncpa [#allocation6], 1
    %520 = vsyncpa [#allocation9], 1
    %s521 = scalar_lea.sflag [#allocation9], 1
    %522 = vsyncpa %s521, 1
    %523 = vsyncpa [#allocation4], 1
    %s524 = scalar_lea.sflag [#allocation4], 1
    %525 = vsyncpa %s524, 1

</llo_original>
